<compile_context>
chip_gen: v7x
topology: tpu7x:2x2x1
jax: 0.10.0
libtpu: 0.0.40
codegen_flags: <defaults>
</compile_context>

<pallas_src>
import jax
import jax.numpy as jnp
from jax.experimental import pallas as pl
from jax.experimental.pallas import tpu as pltpu


def _bound_final_kernel(lower_ref, upper_ref, tgt_ref, res_ref):
    lower = lower_ref[...]          # [TB, C_pad]
    upper = upper_ref[...]          # [TB, C_pad]
    tgt = tgt_ref[...]              # [TB, 1] int32

    tb, c = lower.shape
    col = jax.lax.broadcasted_iota(jnp.int32, (tb, c), 1)
    onehot = col == tgt             # one True per row at targets[b] (padded cols never hit)

    # gather(lower, dim=1, index=targets): masked row-sum (padded cols are 0, onehot False)
    lower_t = jnp.sum(jnp.where(onehot, lower, 0.0), axis=1, keepdims=True)   # [TB, 1]

    # fused (upper - lower_t) broadcast + scatter-0 at the target column
    res_ref[...] = jnp.where(onehot, 0.0, upper - lower_t).astype(res_ref.dtype)


def _choose_tb(B, C_pad, itemsize):
    # ~2 MiB per (TB, C_pad) tile, TB a multiple of 8, no larger than needed for B.
    target_bytes = 2 * 1024 * 1024
    tb = target_bytes // max(1, C_pad * itemsize)
    tb = max(8, (tb // 8) * 8)
    b_rounded = ((B + 7) // 8) * 8
    return max(8, min(tb, 1024, b_rounded))


def _bound_final_pallas(lower, upper, targets, res_dtype):
    B, C = lower.shape
    itemsize = jnp.dtype(res_dtype).itemsize

    C_pad = ((C + 127) // 128) * 128            # lane-dense output tiles
    tb = _choose_tb(B, C_pad, itemsize)
    B_pad = pl.cdiv(B, tb) * tb

    lower_p = jnp.pad(lower, ((0, B_pad - B), (0, C_pad - C)))
    upper_p = jnp.pad(upper, ((0, B_pad - B), (0, C_pad - C)))
    tgt_p = jnp.pad(targets.astype(jnp.int32).reshape(B, 1), ((0, B_pad - B), (0, 0)))

    res = pl.pallas_call(
        _bound_final_kernel,
        out_shape=jax.ShapeDtypeStruct((B_pad, C_pad), res_dtype),
        grid=(B_pad // tb,),
        in_specs=[
            pl.BlockSpec((tb, C_pad), lambda i: (i, 0)),   # lower
            pl.BlockSpec((tb, C_pad), lambda i: (i, 0)),   # upper
            pl.BlockSpec((tb, 1), lambda i: (i, 0)),       # targets [TB,1] int32
        ],
        out_specs=pl.BlockSpec((tb, C_pad), lambda i: (i, 0)),
        compiler_params=pltpu.CompilerParams(
            dimension_semantics=("parallel",),             # megacore split on v7x
        ),
    )(lower_p, upper_p, tgt_p)

    return res[:B, :C]


def bound_final_identity(x, lower=None, upper=None, targets=None, *, force_pallas=False):
    """Pallas implementation of BoundFinalIdentity.forward."""
    if lower is None or upper is None or targets is None:
        return x  # pure identity, no copy

    B, C = lower.shape
    res_dtype = jnp.result_type(upper.dtype, lower.dtype)

    # Tiny shapes: a pallas_call's launch/DMA-setup overhead dwarfs ~KiB of work.
    if not force_pallas and B * C < (1 << 14):
        tgt = targets.astype(jnp.int32)[:, None]
        lower_t = jnp.take_along_axis(lower, tgt, axis=1)
        onehot = jax.lax.broadcasted_iota(jnp.int32, (B, C), 1) == tgt
        res = jnp.where(onehot, jnp.zeros((), res_dtype),
                        (upper - lower_t).astype(res_dtype))
        return x, res

    res = _bound_final_pallas(lower, upper, targets, res_dtype)
    return x, res


def _reference(x, lower, upper, targets):
    # Pure-JAX reference for correctness check.
    B, C = lower.shape
    lower_t = lower[jnp.arange(B), targets][:, None]
    res = upper - lower_t
    res = res.at[jnp.arange(B), targets].set(0.0)
    return x, res


if __name__ == "__main__":
    key = jax.random.PRNGKey(0)
    k1, k2, k3, k4 = jax.random.split(key, 4)

    B, C = 8, 32
    x = jax.random.normal(k1, (B, C), dtype=jnp.float32)
    lower = jax.random.normal(k2, (B, C), dtype=jnp.float32)
    upper = lower + jnp.abs(jax.random.normal(k3, (B, C), dtype=jnp.float32))
    targets = jax.random.randint(k4, (B,), 0, C, dtype=jnp.int32)

    x_ref, res_ref = _reference(x, lower, upper, targets)

    # Path 1: identity (no bounds supplied) -> returns x itself, no copy.
    y = bound_final_identity(x)
    jax.block_until_ready(y)
    assert jnp.allclose(y, x)

    # Path 2: small-shape fallback (pure JAX, XLA-fused).
    x_out, res = bound_final_identity(x, lower, upper, targets)
    jax.block_until_ready((x_out, res))
    assert jnp.allclose(x_out, x_ref)
    assert jnp.allclose(res, res_ref, atol=1e-6)

    # Path 3: forced Pallas kernel path (exercises the tiled kernel).
    x_out_p, res_p = bound_final_identity(x, lower, upper, targets, force_pallas=True)
    jax.block_until_ready((x_out_p, res_p))
    assert jnp.allclose(x_out_p, x_ref)
    assert jnp.allclose(res_p, res_ref, atol=1e-6)

    print("KERNEL_OK")
</pallas_src>

<mosaic_0001>
module attributes {stable_mosaic.version = 11 : i64} {
  func.func @_bound_final_kernel(%arg0: i32, %arg1: memref<8x128xf32, #tpu.memory_space<vmem>>, %arg2: memref<8x128xf32, #tpu.memory_space<vmem>>, %arg3: memref<8x1xi32, #tpu.memory_space<vmem>>, %arg4: memref<8x128xf32, #tpu.memory_space<vmem>>) attributes {dimension_semantics = [#tpu.dimension_semantics<parallel>], iteration_bounds = array<i64: 1>, scalar_prefetch = 0 : i64, scratch_operands = 0 : i64, tpu.core_type = #tpu.core_type<tc>, window_params = [{transform_indices = @transform_0, window_bounds = array<i64: 8, 128>}, {transform_indices = @transform_1, window_bounds = array<i64: 8, 128>}, {transform_indices = @transform_2, window_bounds = array<i64: 8, 1>}, {transform_indices = @transform_3, window_bounds = array<i64: 8, 128>}]} {
    %c0 = arith.constant 0 : index
    %c0_0 = arith.constant 0 : index
    %0 = vector.load %arg1[%c0, %c0_0] : memref<8x128xf32, #tpu.memory_space<vmem>>, vector<8x128xf32>
    %c0_1 = arith.constant 0 : index
    %c0_2 = arith.constant 0 : index
    %1 = vector.load %arg2[%c0_1, %c0_2] : memref<8x128xf32, #tpu.memory_space<vmem>>, vector<8x128xf32>
    %c0_3 = arith.constant 0 : index
    %c0_4 = arith.constant 0 : index
    %2 = vector.load %arg3[%c0_3, %c0_4] : memref<8x1xi32, #tpu.memory_space<vmem>>, vector<8x1xi32>
    %3 = tpu.iota {dimensions = array<i32: 1>} : vector<8x128xi32>
    %4 = vector.broadcast %2 : vector<8x1xi32> to vector<8x128xi32>
    %5 = arith.cmpi eq, %3, %4 : vector<8x128xi32>
    %cst = arith.constant 0.000000e+00 : f32
    %6 = vector.broadcast %cst : f32 to vector<8x128xf32>
    %7 = arith.select %5, %0, %6 : vector<8x128xi1>, vector<8x128xf32>
    %cst_5 = arith.constant dense<0.000000e+00> : vector<8xf32>
    %8 = vector.multi_reduction <add>, %7, %cst_5 [1] : vector<8x128xf32> to vector<8xf32>
    %9 = vector.shape_cast %8 : vector<8xf32> to vector<8x1xf32>
    %10 = vector.broadcast %9 : vector<8x1xf32> to vector<8x128xf32>
    %11 = arith.subf %1, %10 : vector<8x128xf32>
    %cst_6 = arith.constant 0.000000e+00 : f32
    %12 = vector.broadcast %cst_6 : f32 to vector<8x128xf32>
    %13 = arith.select %5, %12, %11 : vector<8x128xi1>, vector<8x128xf32>
    %c0_7 = arith.constant 0 : index
    %c0_8 = arith.constant 0 : index
    %14 = vector.load %arg4[%c0_7, %c0_8] : memref<8x128xf32, #tpu.memory_space<vmem>>, vector<8x128xf32>
    tpu.vector_store %arg4[%c0_7, %c0_8], %13 {strides = array<i32>} : memref<8x128xf32, #tpu.memory_space<vmem>>, vector<8x128xf32>,
    return
  }
  func.func @transform_0(%arg0: i32) -> (i32, i32) {
    %c0_i32 = arith.constant 0 : i32
    %c0_i32_0 = arith.constant 0 : i32
    return %arg0, %c0_i32 : i32, i32
  }
  func.func @transform_1(%arg0: i32) -> (i32, i32) {
    %c0_i32 = arith.constant 0 : i32
    %c0_i32_0 = arith.constant 0 : i32
    return %arg0, %c0_i32 : i32, i32
  }
  func.func @transform_2(%arg0: i32) -> (i32, i32) {
    %c0_i32 = arith.constant 0 : i32
    %c0_i32_0 = arith.constant 0 : i32
    return %arg0, %c0_i32 : i32, i32
  }
  func.func @transform_3(%arg0: i32) -> (i32, i32) {
    %c0_i32 = arith.constant 0 : i32
    %c0_i32_0 = arith.constant 0 : i32
    return %arg0, %c0_i32 : i32, i32
  }
}

</mosaic_0001>

<llo_original>
// kernel: tpu_custom_call.1
$region0: #{tpu_custom_call.1}
  #allocation0 [shape = 'u32[]', space=smem, size = 0x4, offset = 0x4, fixed_abs, tag = 'smem constant byte address 0x4 - core index']
  #allocation1 [shape = 'u32[144,128]{1,0:T(1,128)}', space=vmem, size = 0x12000, scoped, tag = 'internal scratch']
  %s0 = inlined_call_operand.vmem [shape: f32[8,128], index: 0, kind: input, shape index: {}]
  %s1 = inlined_call_operand.hbm [shape: f32[8,128], index: 1, kind: input, shape index: {}]
  %s2 = inlined_call_operand.vmem [shape: s32[8,1], index: 2, kind: input, shape index: {}]
  %s3 = inlined_call_operand.hbm [shape: f32[8,128], index: 3, kind: output, shape index: {}]
  %s4 = sld [smem:[#allocation0]]
  $region26: #{tpu_custom_call.1} parent=0
    _
  %s6 = ssub.s32 1, %s4
  %s7 = scalar_select 0, %s6, %s4
  $region1: #{tpu_custom_call.1} parent=0
    #allocation2 [shape = 'u8[4096]{0}', space=vmem, size = 0x1000, scoped, tag = 'input window, operand 1, single buffered']
    #allocation3 [shape = 's32[1]{0}', space=sflag, size = 0x4, scoped, tag = 'scoped memory for tpu_custom_call.1']
    #allocation4 [shape = 's32[1]{0}', space=sflag, size = 0x4, scoped, tag = 'scoped memory for tpu_custom_call.1']
    #allocation5 [shape = 'u8[4096]{0}', space=vmem, size = 0x1000, scoped, tag = 'output window, operand 0, single buffered']
    %8 = vsyncpa [#allocation3], 0
    %9 = vsyncpa [#allocation4], 0
    // Predicated region
    $region2: #{tpu_custom_call.1} parent=1 // pred_check
      _
    $region3: #{tpu_custom_call.1} parent=1 // pred_check_branch
      %11 = sbr.rel (0) target = $region5
    $region4: #{tpu_custom_call.1} parent=1 // pred_region
      _
    $region5: #{tpu_custom_call.1} parent=1 // pred_fallthru
      _
    // Predicated region
    $region6: #{tpu_custom_call.1} parent=1 // pred_check
      _
    $region7: #{tpu_custom_call.1} parent=1 // pred_check_branch
      %13 = sbr.rel (0) target = $region9
    $region8: #{tpu_custom_call.1} parent=1 // pred_region
      %s15 = ssub.s32 128, 128
      %16 = vsyncadd [#allocation3], %s15
      %s18 = sshll.u32 [#allocation2], 4
      %s19 = int_to_ptr.vmem [resolvable:$true] %s18
      %21 = dma.hbm_to_vmem [thread:$0]  %s1, 128, %s19, [#allocation3]
    $region9: #{tpu_custom_call.1} parent=1 // pred_fallthru
      _
    // Predicated region
    $region10: #{tpu_custom_call.1} parent=1 // pred_check
      _
    $region11: #{tpu_custom_call.1} parent=1 // pred_check_branch
      %23 = sbr.rel (0) target = $region13
    $region12: #{tpu_custom_call.1} parent=1 // pred_region
      _
    $region13: #{tpu_custom_call.1} parent=1 // pred_fallthru
      _
    // Predicated region
    $region14: #{tpu_custom_call.1} parent=1 // pred_check
      _
    $region15: #{tpu_custom_call.1} parent=1 // pred_check_branch
      %25 = sbr.rel (0) target = $region17
    $region16: #{tpu_custom_call.1} parent=1 // pred_region
      %26 = dma.done [#allocation3], 128
    $region17: #{tpu_custom_call.1} parent=1 // pred_fallthru
      _
    %v27 = vld [vmem:[%s0] sm:$0xff]
    %v28 = vld [vmem:[#allocation2] sm:$0xff]
    %v29 = vld [vmem:[%s2] sm:$0xff]
    %v30 = vlaneseq
    %v31 = vand.u32 %v30, 127
    %32 = vset.pattern.permute.xlu0 0
    %33 = vperm.xlu0 %32, %v29
    %v34 = vpop.permute.xlu0 %33
    %vm35 = vcmp.eq.s32.totalorder %v31, %v34
    %v36 = vsel %vm35, %v27, 0.0
    %37 = vadd.xlane.f32.xlu0 %v36
    %v38 = vpop.xlane.xlu0 %37
    %v39 = vsub.f32 %v28, %v38
    %v40 = vsel %vm35, 0.0, %v39
    %41 = vst [vmem:[#allocation5] sm:$0xff] %v40
    // Predicated region
    $region18: #{tpu_custom_call.1} parent=1 // pred_check
      _
    $region19: #{tpu_custom_call.1} parent=1 // pred_check_branch
      %43 = sbr.rel (0) target = $region21
    $region20: #{tpu_custom_call.1} parent=1 // pred_region
      %s45 = ssub.s32 128, 128
      %46 = vsyncadd [#allocation4], %s45
      %s48 = sshll.u32 [#allocation5], 4
      %s49 = int_to_ptr.vmem [resolvable:$true] %s48
      %51 = dma.vmem_to_hbm [thread:$0]  %s49, 128, %s3, [#allocation4]
    $region21: #{tpu_custom_call.1} parent=1 // pred_fallthru
      _
    // Predicated region
    $region22: #{tpu_custom_call.1} parent=1 // pred_check
      _
    $region23: #{tpu_custom_call.1} parent=1 // pred_check_branch
      %53 = sbr.rel (0) target = $region25
    $region24: #{tpu_custom_call.1} parent=1 // pred_region
      %54 = dma.done [#allocation4], 128
    $region25: #{tpu_custom_call.1} parent=1 // pred_fallthru
      _
    %55 = vsyncpa [#allocation3], 1
    %56 = vsyncpa [#allocation4], 1

</llo_original>
